<compile_context>
chip_gen: v7x
topology: tpu7x:2x2x1
jax: 0.10.0
libtpu: 0.0.40
codegen_flags: <defaults>
</compile_context>

<pallas_src>
import functools

import jax
import jax.numpy as jnp
from jax import lax
from jax.experimental import pallas as pl
from jax.experimental.pallas import tpu as pltpu

_LANE = 128
_SUBLANE = 8


def _round_up(n, m):
    return ((n + m - 1) // m) * m


def _acnet_kernel(x_ref, w1_ref, b1_ref, w2_ref, b2_ref, w3_ref, b3_ref,
                  wh_ref, bh_ref, out_ref, *, num_actions, act_dtype):
    """One (tile_b, D) batch tile of the actor-critic forward pass."""
    cdt = w1_ref.dtype            # matmul-operand dtype (f32 or bf16)

    # Cast x on the tile inside the kernel (VPU work hidden behind the DMA);
    # no wrapper-side padded/cast copy of x ever hits HBM.
    x = x_ref[...].astype(cdt)    # (TB, D)

    def layer(h, w_ref, b_ref):
        # MXU accumulates in f32; bias add in f32; tanh in act_dtype; the
        # trailing astype feeds the next matmul directly (no-op when equal).
        acc = jnp.dot(h, w_ref[...], preferred_element_type=jnp.float32)
        acc = acc + b_ref[...]
        return jnp.tanh(acc.astype(act_dtype)).astype(cdt)

    h = layer(x, w1_ref, b1_ref)          # (TB, 128)
    h = layer(h, w2_ref, b2_ref)
    h = layer(h, w3_ref, b3_ref)

    # Fused, lane-padded heads: wh = [action.W | value.W | zeros] -> (128,128)
    # Padded columns/biases are exactly zero, so lanes >= num_actions+1 of
    # `combined` are exactly 0 and lane `num_actions` carries the value head.
    combined = jnp.dot(h, wh_ref[...],
                       preferred_element_type=jnp.float32) + bh_ref[...]

    # Masked softmax over the first `num_actions` lanes (exp never sees -inf).
    col = lax.broadcasted_iota(jnp.int32, combined.shape, dimension=1)
    is_action = col < num_actions
    masked_logits = jnp.where(is_action, combined, -jnp.inf)
    m = jnp.max(masked_logits, axis=-1, keepdims=True)
    e = jnp.where(is_action, jnp.exp(combined - m), 0.0)
    denom = jnp.sum(e, axis=-1, keepdims=True)
    probs = e / denom                      # exact: probabilities sum to 1

    out_full = jnp.where(is_action, probs, combined)   # (TB, 128)
    # Narrow store: only the num_actions+1 useful lanes go back to HBM.
    out_ref[...] = out_full[:, :out_ref.shape[1]]


def actor_critic_forward(x, params, num_actions, *, tile_b=512,
                         compute_dtype=jnp.float32, act_dtype=jnp.float32):
    """cat([softmax(action_head(f(x))), value_head(f(x))], axis=1).

    compute_dtype: dtype of the matmul operands (bf16 recommended on all TPU
        generations when compute-bound; f32 is the exact default).
    act_dtype: dtype of the tanh activations (bf16 only sensible on v6e/v7x;
        keep f32 on v5e).
    """
    w1, b1, w2, b2, w3, b3, wa, ba, wv, bv = params
    B, D = x.shape
    H = w1.shape[1]
    A = num_actions
    OUT = A + 1
    HEAD = _round_up(max(OUT, _LANE), _LANE)   # 128-lane fused head GEMM

    # --- tiny wrapper-side weight prep (a few hundred KB, one pass) --------
    cdt = compute_dtype
    wh = jnp.zeros((H, HEAD), jnp.float32)
    wh = wh.at[:, :A].set(wa).at[:, A:A + 1].set(wv)
    bh = jnp.zeros((1, HEAD), jnp.float32)
    bh = bh.at[:, :A].set(ba).at[:, A:A + 1].set(bv)
    w1_c = w1.astype(cdt)
    w2_c = w2.astype(cdt)
    w3_c = w3.astype(cdt)
    wh_c = wh.astype(cdt)

    # --- batch tiling: no padding of x ---------------------------------------
    # A block equal to the full batch dim is always legal, so small batches
    # get a single full-extent block; otherwise use a sublane-aligned tile and
    # let Pallas mask the partial last block (pl.cdiv grid).
    # (On v7x, pick tile_b <= B/2 so the "parallel" grid spans both TCs.)
    if B <= tile_b:
        tb = B
    else:
        tb = _round_up(min(tile_b, B), _SUBLANE)
    grid = (pl.cdiv(B, tb),)

    kernel = functools.partial(_acnet_kernel, num_actions=A,
                               act_dtype=act_dtype)

    out = pl.pallas_call(
        kernel,
        out_shape=jax.ShapeDtypeStruct((B, OUT), jnp.float32),
        grid_spec=pltpu.PrefetchScalarGridSpec(
            num_scalar_prefetch=0,
            grid=grid,
            in_specs=[
                pl.BlockSpec((tb, D), lambda i: (i, 0)),     # x tile (uncast)
                pl.BlockSpec((D, H), lambda i: (0, 0)),      # W1
                pl.BlockSpec((1, H), lambda i: (0, 0)),      # b1
                pl.BlockSpec((H, H), lambda i: (0, 0)),      # W2
                pl.BlockSpec((1, H), lambda i: (0, 0)),      # b2
                pl.BlockSpec((H, H), lambda i: (0, 0)),      # W3
                pl.BlockSpec((1, H), lambda i: (0, 0)),      # b3
                pl.BlockSpec((H, HEAD), lambda i: (0, 0)),   # fused head W
                pl.BlockSpec((1, HEAD), lambda i: (0, 0)),   # fused head b
            ],
            out_specs=pl.BlockSpec((tb, OUT), lambda i: (i, 0)),
        ),
        compiler_params=pltpu.CompilerParams(
            dimension_semantics=("parallel",)),
    )(x, w1_c, b1, w2_c, b2, w3_c, b3, wh_c, bh)

    return out


def init_params(key, num_observations, num_actions, hidden=128):
    """PyTorch-Linear-style init (uniform +-1/sqrt(fan_in)).

    Weights are stored transposed: (in_features, out_features).
    """
    def linear(k, fan_in, fan_out):
        kw, kb = jax.random.split(k)
        bound = 1.0 / jnp.sqrt(fan_in)
        w = jax.random.uniform(kw, (fan_in, fan_out), jnp.float32,
                               minval=-bound, maxval=bound)
        b = jax.random.uniform(kb, (1, fan_out), jnp.float32,
                               minval=-bound, maxval=bound)
        return w, b

    ks = jax.random.split(key, 5)
    w1, b1 = linear(ks[0], num_observations, hidden)
    w2, b2 = linear(ks[1], hidden, hidden)
    w3, b3 = linear(ks[2], hidden, hidden)
    wa, ba = linear(ks[3], hidden, num_actions)
    wv, bv = linear(ks[4], hidden, 1)
    return (w1, b1, w2, b2, w3, b3, wa, ba, wv, bv)


def reference_forward(x, params, num_actions):
    """Pure-JAX reference (mirrors the PyTorch forward)."""
    w1, b1, w2, b2, w3, b3, wa, ba, wv, bv = params
    h = jnp.tanh(x @ w1 + b1)
    h = jnp.tanh(h @ w2 + b2)
    h = jnp.tanh(h @ w3 + b3)
    logits = h @ wa + ba
    probs = jax.nn.softmax(logits, axis=1)
    v = h @ wv + bv
    return jnp.concatenate([probs, v], axis=1)


if __name__ == "__main__":
    num_observations = 16
    num_actions = 4
    batch = 2

    key = jax.random.PRNGKey(0)
    k_params, k_x, k_x2 = jax.random.split(key, 3)
    params = init_params(k_params, num_observations, num_actions)
    x = jax.random.normal(k_x, (batch, num_observations), jnp.float32)

    ref = reference_forward(x, params, num_actions)

    # Exact f32 path (single full-extent batch block).
    out = actor_critic_forward(x, params, num_actions)
    out = jax.block_until_ready(out)
    assert out.shape == (batch, num_actions + 1), out.shape
    assert jnp.allclose(out, ref, atol=1e-4, rtol=1e-4), (out, ref)

    # Multi-step grid with a partial last block (exercises pl.cdiv masking).
    x_big = jax.random.normal(k_x2, (20, num_observations), jnp.float32)
    ref_big = reference_forward(x_big, params, num_actions)
    out_big = actor_critic_forward(x_big, params, num_actions, tile_b=16)
    out_big = jax.block_until_ready(out_big)
    assert out_big.shape == (20, num_actions + 1), out_big.shape
    assert jnp.allclose(out_big, ref_big, atol=1e-4, rtol=1e-4)

    # bf16 matmul operands + f32 accumulation/activations (safe on all gens).
    out_bf16 = actor_critic_forward(x, params, num_actions,
                                    compute_dtype=jnp.bfloat16)
    out_bf16 = jax.block_until_ready(out_bf16)
    assert out_bf16.shape == (batch, num_actions + 1), out_bf16.shape
    assert jnp.allclose(out_bf16, ref, atol=5e-2, rtol=5e-2), (out_bf16, ref)

    print("KERNEL_OK")
</pallas_src>

<mosaic_0001>
module attributes {stable_mosaic.version = 11 : i64} {
  func.func @_acnet_kernel(%arg0: i32, %arg1: memref<2x16xf32, #tpu.memory_space<vmem>>, %arg2: memref<16x128xf32, #tpu.memory_space<vmem>>, %arg3: memref<1x128xf32, #tpu.memory_space<vmem>>, %arg4: memref<128x128xf32, #tpu.memory_space<vmem>>, %arg5: memref<1x128xf32, #tpu.memory_space<vmem>>, %arg6: memref<128x128xf32, #tpu.memory_space<vmem>>, %arg7: memref<1x128xf32, #tpu.memory_space<vmem>>, %arg8: memref<128x128xf32, #tpu.memory_space<vmem>>, %arg9: memref<1x128xf32, #tpu.memory_space<vmem>>, %arg10: memref<2x5xf32, #tpu.memory_space<vmem>>) attributes {dimension_semantics = [#tpu.dimension_semantics<parallel>], iteration_bounds = array<i64: 1>, scalar_prefetch = 0 : i64, scratch_operands = 0 : i64, tpu.core_type = #tpu.core_type<tc>, window_params = [{transform_indices = @transform_0, window_bounds = array<i64: 2, 16>}, {pipeline_mode = #tpu.pipeline_mode<synchronous>, transform_indices = @transform_1, window_bounds = array<i64: 16, 128>}, {pipeline_mode = #tpu.pipeline_mode<synchronous>, transform_indices = @transform_2, window_bounds = array<i64: 1, 128>}, {pipeline_mode = #tpu.pipeline_mode<synchronous>, transform_indices = @transform_3, window_bounds = array<i64: 128, 128>}, {pipeline_mode = #tpu.pipeline_mode<synchronous>, transform_indices = @transform_4, window_bounds = array<i64: 1, 128>}, {pipeline_mode = #tpu.pipeline_mode<synchronous>, transform_indices = @transform_5, window_bounds = array<i64: 128, 128>}, {pipeline_mode = #tpu.pipeline_mode<synchronous>, transform_indices = @transform_6, window_bounds = array<i64: 1, 128>}, {pipeline_mode = #tpu.pipeline_mode<synchronous>, transform_indices = @transform_7, window_bounds = array<i64: 128, 128>}, {pipeline_mode = #tpu.pipeline_mode<synchronous>, transform_indices = @transform_8, window_bounds = array<i64: 1, 128>}, {transform_indices = @transform_9, window_bounds = array<i64: 2, 5>}]} {
    %c0 = arith.constant 0 : index
    %c0_0 = arith.constant 0 : index
    %0 = vector.load %arg1[%c0, %c0_0] : memref<2x16xf32, #tpu.memory_space<vmem>>, vector<2x16xf32>
    %c0_1 = arith.constant 0 : index
    %c0_2 = arith.constant 0 : index
    %1 = vector.load %arg2[%c0_1, %c0_2] : memref<16x128xf32, #tpu.memory_space<vmem>>, vector<16x128xf32>
    %cst = arith.constant dense<0.000000e+00> : vector<2x128xf32>
    %2 = tpu.matmul %0, %1, %cst {dimension_numbers = #tpu.dot_dimension_numbers<[1], [0], [0], [1], [0, 0, 1, 1], [], []>} : vector<2x16xf32>, vector<16x128xf32>, vector<2x128xf32> -> vector<2x128xf32>
    %c0_3 = arith.constant 0 : index
    %c0_4 = arith.constant 0 : index
    %3 = vector.load %arg3[%c0_3, %c0_4] : memref<1x128xf32, #tpu.memory_space<vmem>>, vector<1x128xf32>
    %4 = vector.broadcast %3 : vector<1x128xf32> to vector<2x128xf32>
    %5 = arith.addf %2, %4 : vector<2x128xf32>
    %6 = math.tanh %5 : vector<2x128xf32>
    %c0_5 = arith.constant 0 : index
    %c0_6 = arith.constant 0 : index
    %7 = vector.load %arg4[%c0_5, %c0_6] : memref<128x128xf32, #tpu.memory_space<vmem>>, vector<128x128xf32>
    %cst_7 = arith.constant dense<0.000000e+00> : vector<2x128xf32>
    %8 = tpu.matmul %6, %7, %cst_7 {dimension_numbers = #tpu.dot_dimension_numbers<[1], [0], [0], [1], [0, 0, 1, 1], [], []>} : vector<2x128xf32>, vector<128x128xf32>, vector<2x128xf32> -> vector<2x128xf32>
    %c0_8 = arith.constant 0 : index
    %c0_9 = arith.constant 0 : index
    %9 = vector.load %arg5[%c0_8, %c0_9] : memref<1x128xf32, #tpu.memory_space<vmem>>, vector<1x128xf32>
    %10 = vector.broadcast %9 : vector<1x128xf32> to vector<2x128xf32>
    %11 = arith.addf %8, %10 : vector<2x128xf32>
    %12 = math.tanh %11 : vector<2x128xf32>
    %c0_10 = arith.constant 0 : index
    %c0_11 = arith.constant 0 : index
    %13 = vector.load %arg6[%c0_10, %c0_11] : memref<128x128xf32, #tpu.memory_space<vmem>>, vector<128x128xf32>
    %cst_12 = arith.constant dense<0.000000e+00> : vector<2x128xf32>
    %14 = tpu.matmul %12, %13, %cst_12 {dimension_numbers = #tpu.dot_dimension_numbers<[1], [0], [0], [1], [0, 0, 1, 1], [], []>} : vector<2x128xf32>, vector<128x128xf32>, vector<2x128xf32> -> vector<2x128xf32>
    %c0_13 = arith.constant 0 : index
    %c0_14 = arith.constant 0 : index
    %15 = vector.load %arg7[%c0_13, %c0_14] : memref<1x128xf32, #tpu.memory_space<vmem>>, vector<1x128xf32>
    %16 = vector.broadcast %15 : vector<1x128xf32> to vector<2x128xf32>
    %17 = arith.addf %14, %16 : vector<2x128xf32>
    %18 = math.tanh %17 : vector<2x128xf32>
    %c0_15 = arith.constant 0 : index
    %c0_16 = arith.constant 0 : index
    %19 = vector.load %arg8[%c0_15, %c0_16] : memref<128x128xf32, #tpu.memory_space<vmem>>, vector<128x128xf32>
    %cst_17 = arith.constant dense<0.000000e+00> : vector<2x128xf32>
    %20 = tpu.matmul %18, %19, %cst_17 {dimension_numbers = #tpu.dot_dimension_numbers<[1], [0], [0], [1], [0, 0, 1, 1], [], []>} : vector<2x128xf32>, vector<128x128xf32>, vector<2x128xf32> -> vector<2x128xf32>
    %c0_18 = arith.constant 0 : index
    %c0_19 = arith.constant 0 : index
    %21 = vector.load %arg9[%c0_18, %c0_19] : memref<1x128xf32, #tpu.memory_space<vmem>>, vector<1x128xf32>
    %22 = vector.broadcast %21 : vector<1x128xf32> to vector<2x128xf32>
    %23 = arith.addf %20, %22 : vector<2x128xf32>
    %24 = tpu.iota {dimensions = array<i32: 1>} : vector<2x128xi32>
    %c4_i32 = arith.constant 4 : i32
    %25 = vector.broadcast %c4_i32 : i32 to vector<2x128xi32>
    %26 = arith.cmpi slt, %24, %25 : vector<2x128xi32>
    %cst_20 = arith.constant 0xFF800000 : f32
    %27 = vector.broadcast %cst_20 : f32 to vector<2x128xf32>
    %28 = arith.select %26, %23, %27 : vector<2x128xi1>, vector<2x128xf32>
    %cst_21 = arith.constant dense<0xFF800000> : vector<2xf32>
    %29 = vector.multi_reduction <maximumf>, %28, %cst_21 [1] : vector<2x128xf32> to vector<2xf32>
    %30 = vector.shape_cast %29 : vector<2xf32> to vector<2x1xf32>
    %31 = vector.broadcast %30 : vector<2x1xf32> to vector<2x128xf32>
    %32 = arith.subf %23, %31 : vector<2x128xf32>
    %33 = math.exp %32 : vector<2x128xf32>
    %cst_22 = arith.constant 0.000000e+00 : f32
    %34 = vector.broadcast %cst_22 : f32 to vector<2x128xf32>
    %35 = arith.select %26, %33, %34 : vector<2x128xi1>, vector<2x128xf32>
    %cst_23 = arith.constant dense<0.000000e+00> : vector<2xf32>
    %36 = vector.multi_reduction <add>, %35, %cst_23 [1] : vector<2x128xf32> to vector<2xf32>
    %37 = vector.shape_cast %36 : vector<2xf32> to vector<2x1xf32>
    %38 = vector.broadcast %37 : vector<2x1xf32> to vector<2x128xf32>
    %39 = arith.divf %35, %38 : vector<2x128xf32>
    %40 = arith.select %26, %39, %23 : vector<2x128xi1>, vector<2x128xf32>
    %41 = vector.extract_strided_slice %40 {offsets = [0, 0], sizes = [2, 5], strides = [1, 1]} : vector<2x128xf32> to vector<2x5xf32>
    %c0_24 = arith.constant 0 : index
    %c0_25 = arith.constant 0 : index
    %42 = vector.load %arg10[%c0_24, %c0_25] : memref<2x5xf32, #tpu.memory_space<vmem>>, vector<2x5xf32>
    tpu.vector_store %arg10[%c0_24, %c0_25], %41 {strides = array<i32>} : memref<2x5xf32, #tpu.memory_space<vmem>>, vector<2x5xf32>,
    return
  }
  func.func @transform_0(%arg0: i32) -> (i32, i32) {
    %c0_i32 = arith.constant 0 : i32
    %c0_i32_0 = arith.constant 0 : i32
    return %arg0, %c0_i32 : i32, i32
  }
  func.func @transform_1(%arg0: i32) -> (i32, i32) {
    %c0_i32 = arith.constant 0 : i32
    %c0_i32_0 = arith.constant 0 : i32
    %c0_i32_1 = arith.constant 0 : i32
    return %c0_i32, %c0_i32_0 : i32, i32
  }
  func.func @transform_2(%arg0: i32) -> (i32, i32) {
    %c0_i32 = arith.constant 0 : i32
    %c0_i32_0 = arith.constant 0 : i32
    %c0_i32_1 = arith.constant 0 : i32
    return %c0_i32, %c0_i32_0 : i32, i32
  }
  func.func @transform_3(%arg0: i32) -> (i32, i32) {
    %c0_i32 = arith.constant 0 : i32
    %c0_i32_0 = arith.constant 0 : i32
    %c0_i32_1 = arith.constant 0 : i32
    return %c0_i32, %c0_i32_0 : i32, i32
  }
  func.func @transform_4(%arg0: i32) -> (i32, i32) {
    %c0_i32 = arith.constant 0 : i32
    %c0_i32_0 = arith.constant 0 : i32
    %c0_i32_1 = arith.constant 0 : i32
    return %c0_i32, %c0_i32_0 : i32, i32
  }
  func.func @transform_5(%arg0: i32) -> (i32, i32) {
    %c0_i32 = arith.constant 0 : i32
    %c0_i32_0 = arith.constant 0 : i32
    %c0_i32_1 = arith.constant 0 : i32
    return %c0_i32, %c0_i32_0 : i32, i32
  }
  func.func @transform_6(%arg0: i32) -> (i32, i32) {
    %c0_i32 = arith.constant 0 : i32
    %c0_i32_0 = arith.constant 0 : i32
    %c0_i32_1 = arith.constant 0 : i32
    return %c0_i32, %c0_i32_0 : i32, i32
  }
  func.func @transform_7(%arg0: i32) -> (i32, i32) {
    %c0_i32 = arith.constant 0 : i32
    %c0_i32_0 = arith.constant 0 : i32
    %c0_i32_1 = arith.constant 0 : i32
    return %c0_i32, %c0_i32_0 : i32, i32
  }
  func.func @transform_8(%arg0: i32) -> (i32, i32) {
    %c0_i32 = arith.constant 0 : i32
    %c0_i32_0 = arith.constant 0 : i32
    %c0_i32_1 = arith.constant 0 : i32
    return %c0_i32, %c0_i32_0 : i32, i32
  }
  func.func @transform_9(%arg0: i32) -> (i32, i32) {
    %c0_i32 = arith.constant 0 : i32
    %c0_i32_0 = arith.constant 0 : i32
    return %arg0, %c0_i32 : i32, i32
  }
}

</mosaic_0001>

<llo_original>
// kernel: tpu_custom_call.1
$region0: #{tpu_custom_call.1}
  #allocation0 [shape = 'u32[]', space=smem, size = 0x4, offset = 0x4, fixed_abs, tag = 'smem constant byte address 0x4 - core index']
  #allocation1 [shape = 'u32[144,128]{1,0:T(1,128)}', space=vmem, size = 0x12000, scoped, tag = 'internal scratch']
  %s0 = inlined_call_operand.hbm [shape: f32[2,16], index: 0, kind: input, shape index: {}]
  %s1 = inlined_call_operand.hbm [shape: f32[16,128], index: 1, kind: input, shape index: {}]
  %s2 = inlined_call_operand.vmem [shape: f32[1,128], index: 2, kind: input, shape index: {}]
  %s3 = inlined_call_operand.hbm [shape: f32[128,128], index: 3, kind: input, shape index: {}]
  %s4 = inlined_call_operand.vmem [shape: f32[1,128], index: 4, kind: input, shape index: {}]
  %s5 = inlined_call_operand.hbm [shape: f32[128,128], index: 5, kind: input, shape index: {}]
  %s6 = inlined_call_operand.vmem [shape: f32[1,128], index: 6, kind: input, shape index: {}]
  %s7 = inlined_call_operand.hbm [shape: f32[128,128], index: 7, kind: input, shape index: {}]
  %s8 = inlined_call_operand.vmem [shape: f32[1,128], index: 8, kind: input, shape index: {}]
  %s9 = inlined_call_operand.hbm [shape: f32[2,5], index: 9, kind: output, shape index: {}]
  %s10 = sld [smem:[#allocation0]]
  $region66: #{tpu_custom_call.1} parent=0
    _
  %s12 = ssub.s32 1, %s10
  %s13 = scalar_select 0, %s12, %s10
  $region1: #{tpu_custom_call.1} parent=0
    #allocation2 [shape = 'u8[1024]{0}', space=vmem, size = 0x400, scoped, tag = 'input window, operand 0, single buffered']
    #allocation3 [shape = 's32[1]{0}', space=sflag, size = 0x4, scoped, tag = 'scoped memory for tpu_custom_call.1']
    #allocation4 [shape = 's32[1]{0}', space=sflag, size = 0x4, scoped, tag = 'scoped memory for tpu_custom_call.1']
    #allocation5 [shape = 'u8[8192]{0}', space=vmem, size = 0x2000, scoped, tag = 'input window, operand 1, single buffered']
    #allocation6 [shape = 's32[1]{0}', space=sflag, size = 0x4, scoped, tag = 'scoped memory for tpu_custom_call.1']
    #allocation7 [shape = 'u8[65536]{0}', space=vmem, size = 0x10000, scoped, tag = 'input window, operand 3, single buffered']
    #allocation8 [shape = 'u8[65536]{0}', space=vmem, size = 0x10000, scoped, tag = 'input window, operand 5, single buffered']
    #allocation9 [shape = 's32[1]{0}', space=sflag, size = 0x4, scoped, tag = 'scoped memory for tpu_custom_call.1']
    #allocation10 [shape = 'u8[65536]{0}', space=vmem, size = 0x10000, scoped, tag = 'input window, operand 7, single buffered']
    #allocation11 [shape = 'u8[1024]{0}', space=vmem, size = 0x400, scoped, tag = 'output window, operand 0, single buffered']
    %14 = vsyncpa [#allocation3], 0
    %15 = vsyncpa [#allocation6], 0
    %16 = vsyncpa [#allocation9], 0
    %17 = vsyncpa [#allocation4], 0
    // Predicated region
    $region2: #{tpu_custom_call.1} parent=1 // pred_check
      _
    $region3: #{tpu_custom_call.1} parent=1 // pred_check_branch
      %19 = sbr.rel (0) target = $region5
    $region4: #{tpu_custom_call.1} parent=1 // pred_region
      %s21 = ssub.s32 32, 32
      %22 = vsyncadd [#allocation3], %s21
      %s24 = sshll.u32 [#allocation2], 4
      %s25 = int_to_ptr.vmem [resolvable:$true] %s24
      %27 = dma.hbm_to_vmem [thread:$0]  %s0, 32, %s25, [#allocation3]
    $region5: #{tpu_custom_call.1} parent=1 // pred_fallthru
      _
    // Predicated region
    $region6: #{tpu_custom_call.1} parent=1 // pred_check
      _
    $region7: #{tpu_custom_call.1} parent=1 // pred_check_branch
      %29 = sbr.rel (0) target = $region9
    $region8: #{tpu_custom_call.1} parent=1 // pred_region
      %s31 = ssub.s32 256, 256
      %32 = vsyncadd [#allocation6], %s31
      %s33 = sshll.u32 [#allocation5], 4
      %s34 = int_to_ptr.vmem [resolvable:$true] %s33
      %39 = dma.hbm_to_vmem [thread:$0]  %s1, 256, %s34, [#allocation6], 128, 128, 8
    $region9: #{tpu_custom_call.1} parent=1 // pred_fallthru
      _
    // Predicated region
    $region10: #{tpu_custom_call.1} parent=1 // pred_check
      _
    $region11: #{tpu_custom_call.1} parent=1 // pred_check_branch
      %41 = sbr.rel (0) target = $region13
    $region12: #{tpu_custom_call.1} parent=1 // pred_region
      _
    $region13: #{tpu_custom_call.1} parent=1 // pred_fallthru
      _
    // Predicated region
    $region14: #{tpu_custom_call.1} parent=1 // pred_check
      _
    $region15: #{tpu_custom_call.1} parent=1 // pred_check_branch
      %43 = sbr.rel (0) target = $region17
    $region16: #{tpu_custom_call.1} parent=1 // pred_region
      %s45 = ssub.s32 2048, 2048
      %46 = vsyncadd [#allocation6], %s45
      %s47 = sshll.u32 [#allocation7], 4
      %s48 = int_to_ptr.vmem [resolvable:$true] %s47
      %53 = dma.hbm_to_vmem [thread:$0]  %s3, 2048, %s48, [#allocation6], 128, 128, 8
    $region17: #{tpu_custom_call.1} parent=1 // pred_fallthru
      _
    // Predicated region
    $region18: #{tpu_custom_call.1} parent=1 // pred_check
      _
    $region19: #{tpu_custom_call.1} parent=1 // pred_check_branch
      %55 = sbr.rel (0) target = $region21
    $region20: #{tpu_custom_call.1} parent=1 // pred_region
      _
    $region21: #{tpu_custom_call.1} parent=1 // pred_fallthru
      _
    // Predicated region
    $region22: #{tpu_custom_call.1} parent=1 // pred_check
      _
    $region23: #{tpu_custom_call.1} parent=1 // pred_check_branch
      %57 = sbr.rel (0) target = $region25
    $region24: #{tpu_custom_call.1} parent=1 // pred_region
      %s59 = ssub.s32 2048, 2048
      %60 = vsyncadd [#allocation9], %s59
      %s61 = sshll.u32 [#allocation8], 4
      %s62 = int_to_ptr.vmem [resolvable:$true] %s61
      %67 = dma.hbm_to_vmem [thread:$0]  %s5, 2048, %s62, [#allocation9], 128, 128, 8
    $region25: #{tpu_custom_call.1} parent=1 // pred_fallthru
      _
    // Predicated region
    $region26: #{tpu_custom_call.1} parent=1 // pred_check
      _
    $region27: #{tpu_custom_call.1} parent=1 // pred_check_branch
      %69 = sbr.rel (0) target = $region29
    $region28: #{tpu_custom_call.1} parent=1 // pred_region
      _
    $region29: #{tpu_custom_call.1} parent=1 // pred_fallthru
      _
    // Predicated region
    $region30: #{tpu_custom_call.1} parent=1 // pred_check
      _
    $region31: #{tpu_custom_call.1} parent=1 // pred_check_branch
      %71 = sbr.rel (0) target = $region33
    $region32: #{tpu_custom_call.1} parent=1 // pred_region
      %s73 = ssub.s32 2048, 2048
      %74 = vsyncadd [#allocation9], %s73
      %s75 = sshll.u32 [#allocation10], 4
      %s76 = int_to_ptr.vmem [resolvable:$true] %s75
      %81 = dma.hbm_to_vmem [thread:$0]  %s7, 2048, %s76, [#allocation9], 128, 128, 8
    $region33: #{tpu_custom_call.1} parent=1 // pred_fallthru
      _
    // Predicated region
    $region34: #{tpu_custom_call.1} parent=1 // pred_check
      _
    $region35: #{tpu_custom_call.1} parent=1 // pred_check_branch
      %83 = sbr.rel (0) target = $region37
    $region36: #{tpu_custom_call.1} parent=1 // pred_region
      _
    $region37: #{tpu_custom_call.1} parent=1 // pred_fallthru
      _
    // Predicated region
    $region38: #{tpu_custom_call.1} parent=1 // pred_check
      _
    $region39: #{tpu_custom_call.1} parent=1 // pred_check_branch
      %85 = sbr.rel (0) target = $region41
    $region40: #{tpu_custom_call.1} parent=1 // pred_region
      %86 = dma.done [#allocation3], 32
    $region41: #{tpu_custom_call.1} parent=1 // pred_fallthru
      _
    // Predicated region
    $region42: #{tpu_custom_call.1} parent=1 // pred_check
      _
    $region43: #{tpu_custom_call.1} parent=1 // pred_check_branch
      %88 = sbr.rel (0) target = $region45
    $region44: #{tpu_custom_call.1} parent=1 // pred_region
      %89 = dma.done [#allocation6], 256
    $region45: #{tpu_custom_call.1} parent=1 // pred_fallthru
      _
    // Predicated region
    $region46: #{tpu_custom_call.1} parent=1 // pred_check
      _
    $region47: #{tpu_custom_call.1} parent=1 // pred_check_branch
      %91 = sbr.rel (0) target = $region49
    $region48: #{tpu_custom_call.1} parent=1 // pred_region
      %92 = dma.done [#allocation6], 2048
    $region49: #{tpu_custom_call.1} parent=1 // pred_fallthru
      _
    // Predicated region
    $region50: #{tpu_custom_call.1} parent=1 // pred_check
      _
    $region51: #{tpu_custom_call.1} parent=1 // pred_check_branch
      %94 = sbr.rel (0) target = $region53
    $region52: #{tpu_custom_call.1} parent=1 // pred_region
      %95 = dma.done [#allocation9], 2048
    $region53: #{tpu_custom_call.1} parent=1 // pred_fallthru
      _
    // Predicated region
    $region54: #{tpu_custom_call.1} parent=1 // pred_check
      _
    $region55: #{tpu_custom_call.1} parent=1 // pred_check_branch
      %97 = sbr.rel (0) target = $region57
    $region56: #{tpu_custom_call.1} parent=1 // pred_region
      %98 = dma.done [#allocation9], 2048
    $region57: #{tpu_custom_call.1} parent=1 // pred_fallthru
      _
    %v99 = vld [vmem:[#allocation2] sm:$0x3]
    %v100 = vld [vmem:[#allocation5] sm:$0xff]
    %v101 = vld [vmem:[#allocation5 + $0x8] sm:$0xff]
    %v102 = vld [vmem:[%s2] sm:$0x1]
    %v104 = vlaneseq
    %v105 = vshrl.u32 %v104, 7
    %v106 = vsub.s32 0, %v105
    %v107 = vrot.slane %v102, %v106
    %vm109 = vcmask 130048
    %v111 = vsel %vm109, %v99, 0
    %113 = vmatprep.subr.mxu0 0.0
    %114 = vmatpush1.msra.mxu0 %v100
    %115 = vmatprep.subr.mxu0 0.0
    %116 = vmatpush1.msra.mxu0 %v101
    %117 = vmatprep.subr.mxu0 0.0
    %118 = vmatpush1.msra.mxu0 0.0
    %119 = vmatprep.subr.mxu0 0.0
    %120 = vmatpush1.msra.mxu0 0.0
    %121 = vmatprep.subr.mxu0 0.0
    %122 = vmatpush1.msra.mxu0 0.0
    %123 = vmatprep.subr.mxu0 0.0
    %124 = vmatpush1.msra.mxu0 0.0
    %125 = vmatprep.subr.mxu0 0.0
    %126 = vmatpush1.msra.mxu0 0.0
    %127 = vmatprep.subr.mxu0 0.0
    %128 = vmatpush1.msra.mxu0 0.0
    %129 = vmatprep.subr.mxu0 0.0
    %130 = vmatpush1.msra.mxu0 0.0
    %131 = vmatprep.subr.mxu0 0.0
    %132 = vmatpush1.msra.mxu0 0.0
    %133 = vmatprep.subr.mxu0 0.0
    %134 = vmatpush1.msra.mxu0 0.0
    %135 = vmatprep.subr.mxu0 0.0
    %136 = vmatpush1.msra.mxu0 0.0
    %137 = vmatprep.subr.mxu0 0.0
    %138 = vmatpush1.msra.mxu0 0.0
    %139 = vmatprep.subr.mxu0 0.0
    %140 = vmatpush1.msra.mxu0 0.0
    %141 = vmatprep.subr.mxu0 0.0
    %142 = vmatpush1.msra.mxu0 0.0
    %143 = vmatprep.subr.mxu0 0.0
    %144 = vmatpush1.msra.mxu0 0.0
    %145 = vmatprep.subr.mxu0 0.0
    %146 = vmatpush1.msra.mxu0 0.0
    %147 = vmatprep.subr.mxu0 0.0
    %148 = vmatpush1.msra.mxu0 0.0
    %149 = vmatprep.subr.mxu0 0.0
    %150 = vmatpush1.msra.mxu0 0.0
    %151 = vmatprep.subr.mxu0 0.0
    %152 = vmatpush1.msra.mxu0 0.0
    %153 = vmatprep.subr.mxu0 0.0
    %154 = vmatpush1.msra.mxu0 0.0
    %155 = vmatprep.subr.mxu0 0.0
    %156 = vmatpush1.msra.mxu0 0.0
    %157 = vmatprep.subr.mxu0 0.0
    %158 = vmatpush1.msra.mxu0 0.0
    %159 = vmatprep.subr.mxu0 0.0
    %160 = vmatpush1.msra.mxu0 0.0
    %161 = vmatprep.subr.mxu0 0.0
    %162 = vmatpush1.msra.mxu0 0.0
    %163 = vmatprep.subr.mxu0 0.0
    %164 = vmatpush1.msra.mxu0 0.0
    %165 = vmatprep.subr.mxu0 0.0
    %166 = vmatpush1.msra.mxu0 0.0
    %167 = vmatprep.subr.mxu0 0.0
    %168 = vmatpush1.msra.mxu0 0.0
    %169 = vmatprep.subr.mxu0 0.0
    %170 = vmatpush1.msra.mxu0 0.0
    %171 = vmatprep.subr.mxu0 0.0
    %172 = vmatpush1.msra.mxu0 0.0
    %173 = vmatprep.subr.mxu0 0.0
    %174 = vmatpush1.msra.mxu0 0.0
    %175 = vmatprep.subr.mxu0 0.0
    %176 = vmatpush1.msra.mxu0 0.0
    %177 = vmatprep.mubr.f32.mxu0 0.0
    %178 = vmatmul.mubr.f32.gmra.mrb[0].mxu0 %v111
    %v179 = vpop.f32.mrb[0].mxu0
    %v180 = vadd.f32 %v107, %v179
    %v181 = vpop.f32.mrb[0].mxu0
    %182 = vdwg.mxu0
    %v183 = vtanh.pop %v180
    %v184 = vld [vmem:[#allocation7] sm:$0xff]
    %v185 = vld [vmem:[#allocation7 + $0x8] sm:$0xff]
    %v186 = vld [vmem:[#allocation7 + $0x10] sm:$0xff]
    %v187 = vld [vmem:[#allocation7 + $0x18] sm:$0xff]
    %v188 = vld [vmem:[#allocation7 + $0x20] sm:$0xff]
    %v189 = vld [vmem:[#allocation7 + $0x28] sm:$0xff]
    %v190 = vld [vmem:[#allocation7 + $0x30] sm:$0xff]
    %v191 = vld [vmem:[#allocation7 + $0x38] sm:$0xff]
    %v192 = vld [vmem:[#allocation7 + $0x40] sm:$0xff]
    %v193 = vld [vmem:[#allocation7 + $0x48] sm:$0xff]
    %v194 = vld [vmem:[#allocation7 + $0x50] sm:$0xff]
    %v195 = vld [vmem:[#allocation7 + $0x58] sm:$0xff]
    %v196 = vld [vmem:[#allocation7 + $0x60] sm:$0xff]
    %v197 = vld [vmem:[#allocation7 + $0x68] sm:$0xff]
    %v198 = vld [vmem:[#allocation7 + $0x70] sm:$0xff]
    %v199 = vld [vmem:[#allocation7 + $0x78] sm:$0xff]
    %v200 = vld [vmem:[%s4] sm:$0x1]
    %v202 = vlaneseq
    %v203 = vshrl.u32 %v202, 7
    %v204 = vsub.s32 0, %v203
    %v205 = vrot.slane %v200, %v204
    %207 = vmatprep.subr.mxu0 0.0
    %208 = vmatpush1.msra.mxu0 %v184
    %209 = vmatprep.subr.mxu0 0.0
    %210 = vmatpush1.msra.mxu0 %v185
    %211 = vmatprep.subr.mxu0 0.0
    %212 = vmatpush1.msra.mxu0 %v186
    %213 = vmatprep.subr.mxu0 0.0
    %214 = vmatpush1.msra.mxu0 %v187
    %215 = vmatprep.subr.mxu0 0.0
    %216 = vmatpush1.msra.mxu0 %v188
    %217 = vmatprep.subr.mxu0 0.0
    %218 = vmatpush1.msra.mxu0 %v189
    %219 = vmatprep.subr.mxu0 0.0
    %220 = vmatpush1.msra.mxu0 %v190
    %221 = vmatprep.subr.mxu0 0.0
    %222 = vmatpush1.msra.mxu0 %v191
    %223 = vmatprep.subr.mxu0 0.0
    %224 = vmatpush1.msra.mxu0 %v192
    %225 = vmatprep.subr.mxu0 0.0
    %226 = vmatpush1.msra.mxu0 %v193
    %227 = vmatprep.subr.mxu0 0.0
    %228 = vmatpush1.msra.mxu0 %v194
    %229 = vmatprep.subr.mxu0 0.0
    %230 = vmatpush1.msra.mxu0 %v195
    %231 = vmatprep.subr.mxu0 0.0
    %232 = vmatpush1.msra.mxu0 %v196
    %233 = vmatprep.subr.mxu0 0.0
    %234 = vmatpush1.msra.mxu0 %v197
    %235 = vmatprep.subr.mxu0 0.0
    %236 = vmatpush1.msra.mxu0 %v198
    %237 = vmatprep.subr.mxu0 0.0
    %238 = vmatpush1.msra.mxu0 %v199
    %239 = vmatprep.subr.mxu0 0.0
    %240 = vmatpush1.msra.mxu0 0.0
    %241 = vmatprep.subr.mxu0 0.0
    %242 = vmatpush1.msra.mxu0 0.0
    %243 = vmatprep.subr.mxu0 0.0
    %244 = vmatpush1.msra.mxu0 0.0
    %245 = vmatprep.subr.mxu0 0.0
    %246 = vmatpush1.msra.mxu0 0.0
    %247 = vmatprep.subr.mxu0 0.0
    %248 = vmatpush1.msra.mxu0 0.0
    %249 = vmatprep.subr.mxu0 0.0
    %250 = vmatpush1.msra.mxu0 0.0
    %251 = vmatprep.subr.mxu0 0.0
    %252 = vmatpush1.msra.mxu0 0.0
    %253 = vmatprep.subr.mxu0 0.0
    %254 = vmatpush1.msra.mxu0 0.0
    %255 = vmatprep.subr.mxu0 0.0
    %256 = vmatpush1.msra.mxu0 0.0
    %257 = vmatprep.subr.mxu0 0.0
    %258 = vmatpush1.msra.mxu0 0.0
    %259 = vmatprep.subr.mxu0 0.0
    %260 = vmatpush1.msra.mxu0 0.0
    %261 = vmatprep.subr.mxu0 0.0
    %262 = vmatpush1.msra.mxu0 0.0
    %263 = vmatprep.subr.mxu0 0.0
    %264 = vmatpush1.msra.mxu0 0.0
    %265 = vmatprep.subr.mxu0 0.0
    %266 = vmatpush1.msra.mxu0 0.0
    %267 = vmatprep.subr.mxu0 0.0
    %268 = vmatpush1.msra.mxu0 0.0
    %269 = vmatprep.subr.mxu0 0.0
    %270 = vmatpush1.msra.mxu0 0.0
    %271 = vmatprep.mubr.f32.mxu0 0.0
    %272 = vmatmul.mubr.f32.gmra.mrb[0].mxu0 %v183
    %v273 = vpop.f32.mrb[0].mxu0
    %v274 = vadd.f32 %v205, %v273
    %v275 = vpop.f32.mrb[0].mxu0
    %276 = vdwg.mxu0
    %v277 = vtanh.pop %v274
    %v278 = vld [vmem:[#allocation8] sm:$0xff]
    %v279 = vld [vmem:[#allocation8 + $0x8] sm:$0xff]
    %v280 = vld [vmem:[#allocation8 + $0x10] sm:$0xff]
    %v281 = vld [vmem:[#allocation8 + $0x18] sm:$0xff]
    %v282 = vld [vmem:[#allocation8 + $0x20] sm:$0xff]
    %v283 = vld [vmem:[#allocation8 + $0x28] sm:$0xff]
    %v284 = vld [vmem:[#allocation8 + $0x30] sm:$0xff]
    %v285 = vld [vmem:[#allocation8 + $0x38] sm:$0xff]
    %v286 = vld [vmem:[#allocation8 + $0x40] sm:$0xff]
    %v287 = vld [vmem:[#allocation8 + $0x48] sm:$0xff]
    %v288 = vld [vmem:[#allocation8 + $0x50] sm:$0xff]
    %v289 = vld [vmem:[#allocation8 + $0x58] sm:$0xff]
    %v290 = vld [vmem:[#allocation8 + $0x60] sm:$0xff]
    %v291 = vld [vmem:[#allocation8 + $0x68] sm:$0xff]
    %v292 = vld [vmem:[#allocation8 + $0x70] sm:$0xff]
    %v293 = vld [vmem:[#allocation8 + $0x78] sm:$0xff]
    %v294 = vld [vmem:[%s6] sm:$0x1]
    %v296 = vlaneseq
    %v297 = vshrl.u32 %v296, 7
    %v298 = vsub.s32 0, %v297
    %v299 = vrot.slane %v294, %v298
    %301 = vmatprep.subr.mxu0 0.0
    %302 = vmatpush1.msra.mxu0 %v278
    %303 = vmatprep.subr.mxu0 0.0
    %304 = vmatpush1.msra.mxu0 %v279
    %305 = vmatprep.subr.mxu0 0.0
    %306 = vmatpush1.msra.mxu0 %v280
    %307 = vmatprep.subr.mxu0 0.0
    %308 = vmatpush1.msra.mxu0 %v281
    %309 = vmatprep.subr.mxu0 0.0
    %310 = vmatpush1.msra.mxu0 %v282
    %311 = vmatprep.subr.mxu0 0.0
    %312 = vmatpush1.msra.mxu0 %v283
    %313 = vmatprep.subr.mxu0 0.0
    %314 = vmatpush1.msra.mxu0 %v284
    %315 = vmatprep.subr.mxu0 0.0
    %316 = vmatpush1.msra.mxu0 %v285
    %317 = vmatprep.subr.mxu0 0.0
    %318 = vmatpush1.msra.mxu0 %v286
    %319 = vmatprep.subr.mxu0 0.0
    %320 = vmatpush1.msra.mxu0 %v287
    %321 = vmatprep.subr.mxu0 0.0
    %322 = vmatpush1.msra.mxu0 %v288
    %323 = vmatprep.subr.mxu0 0.0
    %324 = vmatpush1.msra.mxu0 %v289
    %325 = vmatprep.subr.mxu0 0.0
    %326 = vmatpush1.msra.mxu0 %v290
    %327 = vmatprep.subr.mxu0 0.0
    %328 = vmatpush1.msra.mxu0 %v291
    %329 = vmatprep.subr.mxu0 0.0
    %330 = vmatpush1.msra.mxu0 %v292
    %331 = vmatprep.subr.mxu0 0.0
    %332 = vmatpush1.msra.mxu0 %v293
    %333 = vmatprep.subr.mxu0 0.0
    %334 = vmatpush1.msra.mxu0 0.0
    %335 = vmatprep.subr.mxu0 0.0
    %336 = vmatpush1.msra.mxu0 0.0
    %337 = vmatprep.subr.mxu0 0.0
    %338 = vmatpush1.msra.mxu0 0.0
    %339 = vmatprep.subr.mxu0 0.0
    %340 = vmatpush1.msra.mxu0 0.0
    %341 = vmatprep.subr.mxu0 0.0
    %342 = vmatpush1.msra.mxu0 0.0
    %343 = vmatprep.subr.mxu0 0.0
    %344 = vmatpush1.msra.mxu0 0.0
    %345 = vmatprep.subr.mxu0 0.0
    %346 = vmatpush1.msra.mxu0 0.0
    %347 = vmatprep.subr.mxu0 0.0
    %348 = vmatpush1.msra.mxu0 0.0
    %349 = vmatprep.subr.mxu0 0.0
    %350 = vmatpush1.msra.mxu0 0.0
    %351 = vmatprep.subr.mxu0 0.0
    %352 = vmatpush1.msra.mxu0 0.0
    %353 = vmatprep.subr.mxu0 0.0
    %354 = vmatpush1.msra.mxu0 0.0
    %355 = vmatprep.subr.mxu0 0.0
    %356 = vmatpush1.msra.mxu0 0.0
    %357 = vmatprep.subr.mxu0 0.0
    %358 = vmatpush1.msra.mxu0 0.0
    %359 = vmatprep.subr.mxu0 0.0
    %360 = vmatpush1.msra.mxu0 0.0
    %361 = vmatprep.subr.mxu0 0.0
    %362 = vmatpush1.msra.mxu0 0.0
    %363 = vmatprep.subr.mxu0 0.0
    %364 = vmatpush1.msra.mxu0 0.0
    %365 = vmatprep.mubr.f32.mxu0 0.0
    %366 = vmatmul.mubr.f32.gmra.mrb[0].mxu0 %v277
    %v367 = vpop.f32.mrb[0].mxu0
    %v368 = vadd.f32 %v299, %v367
    %v369 = vpop.f32.mrb[0].mxu0
    %370 = vdwg.mxu0
    %v371 = vtanh.pop %v368
    %v372 = vld [vmem:[#allocation10] sm:$0xff]
    %v373 = vld [vmem:[#allocation10 + $0x8] sm:$0xff]
    %v374 = vld [vmem:[#allocation10 + $0x10] sm:$0xff]
    %v375 = vld [vmem:[#allocation10 + $0x18] sm:$0xff]
    %v376 = vld [vmem:[#allocation10 + $0x20] sm:$0xff]
    %v377 = vld [vmem:[#allocation10 + $0x28] sm:$0xff]
    %v378 = vld [vmem:[#allocation10 + $0x30] sm:$0xff]
    %v379 = vld [vmem:[#allocation10 + $0x38] sm:$0xff]
    %v380 = vld [vmem:[#allocation10 + $0x40] sm:$0xff]
    %v381 = vld [vmem:[#allocation10 + $0x48] sm:$0xff]
    %v382 = vld [vmem:[#allocation10 + $0x50] sm:$0xff]
    %v383 = vld [vmem:[#allocation10 + $0x58] sm:$0xff]
    %v384 = vld [vmem:[#allocation10 + $0x60] sm:$0xff]
    %v385 = vld [vmem:[#allocation10 + $0x68] sm:$0xff]
    %v386 = vld [vmem:[#allocation10 + $0x70] sm:$0xff]
    %v387 = vld [vmem:[#allocation10 + $0x78] sm:$0xff]
    %v388 = vld [vmem:[%s8] sm:$0x1]
    %v390 = vlaneseq
    %v391 = vshrl.u32 %v390, 7
    %v392 = vsub.s32 0, %v391
    %v393 = vrot.slane %v388, %v392
    %395 = vmatprep.subr.mxu0 0.0
    %396 = vmatpush1.msra.mxu0 %v372
    %397 = vmatprep.subr.mxu0 0.0
    %398 = vmatpush1.msra.mxu0 %v373
    %399 = vmatprep.subr.mxu0 0.0
    %400 = vmatpush1.msra.mxu0 %v374
    %401 = vmatprep.subr.mxu0 0.0
    %402 = vmatpush1.msra.mxu0 %v375
    %403 = vmatprep.subr.mxu0 0.0
    %404 = vmatpush1.msra.mxu0 %v376
    %405 = vmatprep.subr.mxu0 0.0
    %406 = vmatpush1.msra.mxu0 %v377
    %407 = vmatprep.subr.mxu0 0.0
    %408 = vmatpush1.msra.mxu0 %v378
    %409 = vmatprep.subr.mxu0 0.0
    %410 = vmatpush1.msra.mxu0 %v379
    %411 = vmatprep.subr.mxu0 0.0
    %412 = vmatpush1.msra.mxu0 %v380
    %413 = vmatprep.subr.mxu0 0.0
    %414 = vmatpush1.msra.mxu0 %v381
    %415 = vmatprep.subr.mxu0 0.0
    %416 = vmatpush1.msra.mxu0 %v382
    %417 = vmatprep.subr.mxu0 0.0
    %418 = vmatpush1.msra.mxu0 %v383
    %419 = vmatprep.subr.mxu0 0.0
    %420 = vmatpush1.msra.mxu0 %v384
    %421 = vmatprep.subr.mxu0 0.0
    %422 = vmatpush1.msra.mxu0 %v385
    %423 = vmatprep.subr.mxu0 0.0
    %424 = vmatpush1.msra.mxu0 %v386
    %425 = vmatprep.subr.mxu0 0.0
    %426 = vmatpush1.msra.mxu0 %v387
    %427 = vmatprep.subr.mxu0 0.0
    %428 = vmatpush1.msra.mxu0 0.0
    %429 = vmatprep.subr.mxu0 0.0
    %430 = vmatpush1.msra.mxu0 0.0
    %431 = vmatprep.subr.mxu0 0.0
    %432 = vmatpush1.msra.mxu0 0.0
    %433 = vmatprep.subr.mxu0 0.0
    %434 = vmatpush1.msra.mxu0 0.0
    %435 = vmatprep.subr.mxu0 0.0
    %436 = vmatpush1.msra.mxu0 0.0
    %437 = vmatprep.subr.mxu0 0.0
    %438 = vmatpush1.msra.mxu0 0.0
    %439 = vmatprep.subr.mxu0 0.0
    %440 = vmatpush1.msra.mxu0 0.0
    %441 = vmatprep.subr.mxu0 0.0
    %442 = vmatpush1.msra.mxu0 0.0
    %443 = vmatprep.subr.mxu0 0.0
    %444 = vmatpush1.msra.mxu0 0.0
    %445 = vmatprep.subr.mxu0 0.0
    %446 = vmatpush1.msra.mxu0 0.0
    %447 = vmatprep.subr.mxu0 0.0
    %448 = vmatpush1.msra.mxu0 0.0
    %449 = vmatprep.subr.mxu0 0.0
    %450 = vmatpush1.msra.mxu0 0.0
    %451 = vmatprep.subr.mxu0 0.0
    %452 = vmatpush1.msra.mxu0 0.0
    %453 = vmatprep.subr.mxu0 0.0
    %454 = vmatpush1.msra.mxu0 0.0
    %455 = vmatprep.subr.mxu0 0.0
    %456 = vmatpush1.msra.mxu0 0.0
    %457 = vmatprep.subr.mxu0 0.0
    %458 = vmatpush1.msra.mxu0 0.0
    %459 = vmatprep.mubr.f32.mxu0 0.0
    %460 = vmatmul.mubr.f32.gmra.mrb[0].mxu0 %v371
    %v461 = vpop.f32.mrb[0].mxu0
    %v462 = vadd.f32 %v393, %v461
    %v463 = vpop.f32.mrb[0].mxu0
    %464 = vdwg.mxu0
    %v465 = vlaneseq
    %v466 = vand.u32 %v465, 127
    %vm467 = vcmp.lt.s32.totalorder %v466, 4
    %v468 = vsel %vm467, %v462, -inf
    %vm469 = vcmask 1041408
    %v470 = vsel %vm469, %v468, -inf
    %471 = vmax.xlane.f32.xlu0 %v470
    %v472 = vpop.xlane.xlu0 %471
    %v473 = vsub.f32 %v462, %v472
    %v474 = vmul.f32 %v473, 1.442695
    %v475 = vpow.pop %v474
    %v476 = vsel %vm467, %v475, 0.0
    %v477 = vsel %vm469, %v476, 0.0
    %478 = vadd.xlane.f32.xlu0 %v477
    %v479 = vpop.xlane.xlu0 %478
    %v480 = vrcp.pop %v479
    %v481 = vmul.f32 %v476, %v480
    %v482 = vsel %vm467, %v481, %v462
    %vm483 = vcmask 33792
    %484 = vst.msk [vmem:[#allocation11] sm:$0x3] %vm483, %v482
    // Predicated region
    $region58: #{tpu_custom_call.1} parent=1 // pred_check
      _
    $region59: #{tpu_custom_call.1} parent=1 // pred_check_branch
      %486 = sbr.rel (0) target = $region61
    $region60: #{tpu_custom_call.1} parent=1 // pred_region
      %s488 = ssub.s32 32, 32
      %489 = vsyncadd [#allocation4], %s488
      %s491 = sshll.u32 [#allocation11], 4
      %s492 = int_to_ptr.vmem [resolvable:$true] %s491
      %494 = dma.vmem_to_hbm [thread:$0]  %s492, 32, %s9, [#allocation4]
    $region61: #{tpu_custom_call.1} parent=1 // pred_fallthru
      _
    // Predicated region
    $region62: #{tpu_custom_call.1} parent=1 // pred_check
      _
    $region63: #{tpu_custom_call.1} parent=1 // pred_check_branch
      %496 = sbr.rel (0) target = $region65
    $region64: #{tpu_custom_call.1} parent=1 // pred_region
      %497 = dma.done [#allocation4], 32
    $region65: #{tpu_custom_call.1} parent=1 // pred_fallthru
      _
    %498 = vsyncpa [#allocation3], 1
    %499 = vsyncpa [#allocation6], 1
    %500 = vsyncpa [#allocation9], 1
    %501 = vsyncpa [#allocation4], 1

</llo_original>
